<compile_context>
chip_gen: v5e
topology: v5e:2x2
jax: 0.10.0
libtpu: 0.0.40
codegen_flags: <defaults>
</compile_context>

<pallas_src>
import functools

import jax
import jax.numpy as jnp
from jax.experimental import pallas as pl
from jax.experimental.pallas import tpu as pltpu

_LANE_W = 128          # lane-dense output width (multiple of 128)
_TM_MAX = 8192         # 8192 * 128 * 4 B = 4 MiB per f32 tile


def _mixture_logistics_kernel(p_ref, x_ref, o_ref, *, n_logistics,
                              use_bf16_tanh):
    # p_ref: (4*n_logistics,) f32 in SMEM, packed layout:
    #   [0      : n  )  w  = 0.5 * softmax(pi)
    #   [n      : 2n )  a  = 0.5 / st
    #   [2n     : 3n )  bh = ( 0.5 - mu) * 0.5 / st
    #   [3n     : 4n )  bl = (-0.5 - mu) * 0.5 / st
    # x_ref, o_ref: (TM, 128) f32 tiles in VMEM.
    n = n_logistics
    x = x_ref[...]
    acc = None
    for i in range(n):
        # sigmoid((x+0.5-mu)/st) - sigmoid((x-0.5-mu)/st)
        #   == 0.5 * (tanh(x*a + bh) - tanh(x*a + bl))
        t = x * p_ref[n + i]
        th = t + p_ref[2 * n + i]
        tl = t + p_ref[3 * n + i]
        if use_bf16_tanh:
            # bf16 EUP path (v6e/v7x): ~2x tanh throughput, ~1e-3 accuracy.
            d = (jnp.tanh(th.astype(jnp.bfloat16)).astype(jnp.float32)
                 - jnp.tanh(tl.astype(jnp.bfloat16)).astype(jnp.float32))
        else:
            d = jnp.tanh(th) - jnp.tanh(tl)
        term = p_ref[i] * d
        acc = term if acc is None else acc + term
    o_ref[...] = acc


def _round_up(a, b):
    return ((a + b - 1) // b) * b


def _choose_tm(m_rows):
    """Rows per tile: multiple of 8, <= ~4 MiB, even >=4 grid steps if big."""
    if m_rows <= 16:
        return max(8, _round_up(m_rows, 8))
    steps = max(4, -(-m_rows // _TM_MAX))
    steps += steps % 2                      # even step count (v7x megacore)
    tm = _round_up(-(-m_rows // steps), 8)
    return max(8, min(tm, _TM_MAX))


def mixture_logistics_forward(x, pi, mu, st, *, use_bf16_tanh=False):
    """Pallas equivalent of mixture_logistics.forward.

    x: any-shaped float array (e.g. NCHW). Returns float32 of the same shape.
    pi, mu, st: (n_logistics,) parameters.
    use_bf16_tanh: opt-in bf16 transcendentals (v6e/v7x only; ~1e-3 accuracy).
    """
    n_logistics = pi.shape[0]
    w = jax.nn.softmax(pi.astype(jnp.float32))
    mu = mu.astype(jnp.float32)
    st = st.astype(jnp.float32)

    # Hoist per-component scalar algebra out of the vector path and pack it
    # into a single SMEM array.
    a = 0.5 / st
    b_hi = (0.5 - mu) * a
    b_lo = (-0.5 - mu) * a
    params = jnp.concatenate([0.5 * w, a, b_hi, b_lo]).astype(jnp.float32)

    orig_shape = x.shape
    # Explicit f32 cast: keeps (8,128) f32 tiling valid even for bf16 inputs.
    xf = x.reshape(-1).astype(jnp.float32)
    n_elems = xf.shape[0]

    rem = n_elems % _LANE_W
    if rem:
        # TODO(synk): fully pad-free tail handling (in-kernel mask on the
        # last 1D chunk) would avoid this pad/slice pair for N % 128 != 0.
        xf = jnp.pad(xf, (0, _LANE_W - rem))
    m_rows = xf.shape[0] // _LANE_W
    x2 = xf.reshape(m_rows, _LANE_W)

    tm = _choose_tm(m_rows)
    grid = (pl.cdiv(m_rows, tm),)

    kernel = functools.partial(_mixture_logistics_kernel,
                               n_logistics=n_logistics,
                               use_bf16_tanh=use_bf16_tanh)

    # Real roofline: per element ~2*n_logistics tanh (1 EUP slot),
    # ~6*n_logistics VALU flops, 8 HBM bytes (f32 in + f32 out).
    cost = pl.CostEstimate(
        flops=6 * n_logistics * n_elems,
        transcendentals=2 * n_logistics * n_elems,
        bytes_accessed=8 * n_elems,
    )

    out = pl.pallas_call(
        kernel,
        out_shape=jax.ShapeDtypeStruct((m_rows, _LANE_W), jnp.float32),
        grid_spec=pltpu.PrefetchScalarGridSpec(
            num_scalar_prefetch=0,
            grid=grid,
            in_specs=[
                pl.BlockSpec(memory_space=pltpu.MemorySpace.SMEM),  # params
                pl.BlockSpec((tm, _LANE_W), lambda i: (i, 0)),      # x tile
            ],
            out_specs=pl.BlockSpec((tm, _LANE_W), lambda i: (i, 0)),
        ),
        compiler_params=pltpu.CompilerParams(
            dimension_semantics=("parallel",),
            vmem_limit_bytes=32 * 1024 * 1024,
        ),
        cost_estimate=cost,
    )(params, x2)

    out = out.reshape(-1)
    if rem:
        out = out[:n_elems]
    return out.reshape(orig_shape)


def mixture_logistics_ref(x, pi, mu, st):
    """Pure-JAX reference matching the PyTorch forward exactly (sigmoid form)."""
    w = jax.nn.softmax(pi.astype(jnp.float32))
    x = x.astype(jnp.float32)
    y = jnp.zeros_like(x)
    for i in range(pi.shape[0]):
        y = y + w[i] * (jax.nn.sigmoid((x + 0.5 - mu[i]) / st[i])
                        - jax.nn.sigmoid((x - 0.5 - mu[i]) / st[i]))
    return y


if __name__ == "__main__":
    # module init: n_values, n_logistics
    n_values = 16
    n_logistics = 4

    # deterministic parameter init mirroring the PyTorch __init__
    pi = (1.0 / n_logistics) * jnp.ones((n_logistics,), jnp.float32)
    mu = jnp.linspace(0.0, float(n_values), n_logistics).astype(jnp.float32)
    st = jnp.ones((n_logistics,), jnp.float32)

    # small NCHW-like input of "pixel values" in [0, n_values)
    key = jax.random.PRNGKey(0)
    x = jax.random.uniform(key, (2, 4, 16, 16), jnp.float32,
                           minval=0.0, maxval=float(n_values))

    y = mixture_logistics_forward(x, pi, mu, st)
    y = jax.block_until_ready(y)

    y_ref = mixture_logistics_ref(x, pi, mu, st)
    assert y.shape == x.shape and y.dtype == jnp.float32
    assert jnp.allclose(y, y_ref, atol=1e-5, rtol=1e-5)

    print("KERNEL_OK")
</pallas_src>

<mosaic_0001>
module attributes {stable_mosaic.version = 11 : i64} {
  func.func @_mixture_logistics_kernel(%arg0: i32, %arg1: memref<16xf32, #tpu.memory_space<smem>>, %arg2: memref<16x128xf32, #tpu.memory_space<vmem>>, %arg3: memref<16x128xf32, #tpu.memory_space<vmem>>) attributes {dimension_semantics = [#tpu.dimension_semantics<parallel>], iteration_bounds = array<i64: 1>, scalar_prefetch = 0 : i64, scratch_operands = 0 : i64, tpu.core_type = #tpu.core_type<tc>, window_params = [{transform_indices = @transform_0, window_bounds = array<i64: 16>}, {transform_indices = @transform_1, window_bounds = array<i64: 16, 128>}, {transform_indices = @transform_2, window_bounds = array<i64: 16, 128>}]} {
    %c0 = arith.constant 0 : index
    %c0_0 = arith.constant 0 : index
    %0 = vector.load %arg2[%c0, %c0_0] : memref<16x128xf32, #tpu.memory_space<vmem>>, vector<16x128xf32>
    %c4 = arith.constant 4 : index
    %1 = memref.load %arg1[%c4] : memref<16xf32, #tpu.memory_space<smem>>
    %2 = vector.broadcast %1 : f32 to vector<16x128xf32>
    %3 = arith.mulf %0, %2 : vector<16x128xf32>
    %c8 = arith.constant 8 : index
    %4 = memref.load %arg1[%c8] : memref<16xf32, #tpu.memory_space<smem>>
    %5 = vector.broadcast %4 : f32 to vector<16x128xf32>
    %6 = arith.addf %3, %5 : vector<16x128xf32>
    %c12 = arith.constant 12 : index
    %7 = memref.load %arg1[%c12] : memref<16xf32, #tpu.memory_space<smem>>
    %8 = vector.broadcast %7 : f32 to vector<16x128xf32>
    %9 = arith.addf %3, %8 : vector<16x128xf32>
    %10 = math.tanh %6 : vector<16x128xf32>
    %11 = math.tanh %9 : vector<16x128xf32>
    %12 = arith.subf %10, %11 : vector<16x128xf32>
    %c0_1 = arith.constant 0 : index
    %13 = memref.load %arg1[%c0_1] : memref<16xf32, #tpu.memory_space<smem>>
    %14 = vector.broadcast %13 : f32 to vector<16x128xf32>
    %15 = arith.mulf %14, %12 : vector<16x128xf32>
    %c5 = arith.constant 5 : index
    %16 = memref.load %arg1[%c5] : memref<16xf32, #tpu.memory_space<smem>>
    %17 = vector.broadcast %16 : f32 to vector<16x128xf32>
    %18 = arith.mulf %0, %17 : vector<16x128xf32>
    %c9 = arith.constant 9 : index
    %19 = memref.load %arg1[%c9] : memref<16xf32, #tpu.memory_space<smem>>
    %20 = vector.broadcast %19 : f32 to vector<16x128xf32>
    %21 = arith.addf %18, %20 : vector<16x128xf32>
    %c13 = arith.constant 13 : index
    %22 = memref.load %arg1[%c13] : memref<16xf32, #tpu.memory_space<smem>>
    %23 = vector.broadcast %22 : f32 to vector<16x128xf32>
    %24 = arith.addf %18, %23 : vector<16x128xf32>
    %25 = math.tanh %21 : vector<16x128xf32>
    %26 = math.tanh %24 : vector<16x128xf32>
    %27 = arith.subf %25, %26 : vector<16x128xf32>
    %c1 = arith.constant 1 : index
    %28 = memref.load %arg1[%c1] : memref<16xf32, #tpu.memory_space<smem>>
    %29 = vector.broadcast %28 : f32 to vector<16x128xf32>
    %30 = arith.mulf %29, %27 : vector<16x128xf32>
    %31 = arith.addf %15, %30 : vector<16x128xf32>
    %c6 = arith.constant 6 : index
    %32 = memref.load %arg1[%c6] : memref<16xf32, #tpu.memory_space<smem>>
    %33 = vector.broadcast %32 : f32 to vector<16x128xf32>
    %34 = arith.mulf %0, %33 : vector<16x128xf32>
    %c10 = arith.constant 10 : index
    %35 = memref.load %arg1[%c10] : memref<16xf32, #tpu.memory_space<smem>>
    %36 = vector.broadcast %35 : f32 to vector<16x128xf32>
    %37 = arith.addf %34, %36 : vector<16x128xf32>
    %c14 = arith.constant 14 : index
    %38 = memref.load %arg1[%c14] : memref<16xf32, #tpu.memory_space<smem>>
    %39 = vector.broadcast %38 : f32 to vector<16x128xf32>
    %40 = arith.addf %34, %39 : vector<16x128xf32>
    %41 = math.tanh %37 : vector<16x128xf32>
    %42 = math.tanh %40 : vector<16x128xf32>
    %43 = arith.subf %41, %42 : vector<16x128xf32>
    %c2 = arith.constant 2 : index
    %44 = memref.load %arg1[%c2] : memref<16xf32, #tpu.memory_space<smem>>
    %45 = vector.broadcast %44 : f32 to vector<16x128xf32>
    %46 = arith.mulf %45, %43 : vector<16x128xf32>
    %47 = arith.addf %31, %46 : vector<16x128xf32>
    %c7 = arith.constant 7 : index
    %48 = memref.load %arg1[%c7] : memref<16xf32, #tpu.memory_space<smem>>
    %49 = vector.broadcast %48 : f32 to vector<16x128xf32>
    %50 = arith.mulf %0, %49 : vector<16x128xf32>
    %c11 = arith.constant 11 : index
    %51 = memref.load %arg1[%c11] : memref<16xf32, #tpu.memory_space<smem>>
    %52 = vector.broadcast %51 : f32 to vector<16x128xf32>
    %53 = arith.addf %50, %52 : vector<16x128xf32>
    %c15 = arith.constant 15 : index
    %54 = memref.load %arg1[%c15] : memref<16xf32, #tpu.memory_space<smem>>
    %55 = vector.broadcast %54 : f32 to vector<16x128xf32>
    %56 = arith.addf %50, %55 : vector<16x128xf32>
    %57 = math.tanh %53 : vector<16x128xf32>
    %58 = math.tanh %56 : vector<16x128xf32>
    %59 = arith.subf %57, %58 : vector<16x128xf32>
    %c3 = arith.constant 3 : index
    %60 = memref.load %arg1[%c3] : memref<16xf32, #tpu.memory_space<smem>>
    %61 = vector.broadcast %60 : f32 to vector<16x128xf32>
    %62 = arith.mulf %61, %59 : vector<16x128xf32>
    %63 = arith.addf %47, %62 : vector<16x128xf32>
    %c0_2 = arith.constant 0 : index
    %c0_3 = arith.constant 0 : index
    %64 = vector.load %arg3[%c0_2, %c0_3] : memref<16x128xf32, #tpu.memory_space<vmem>>, vector<16x128xf32>
    tpu.vector_store %arg3[%c0_2, %c0_3], %63 {strides = array<i32>} : memref<16x128xf32, #tpu.memory_space<vmem>>, vector<16x128xf32>,
    return
  }
  func.func @transform_0(%arg0: i32) -> i32 {
    %c0_i32 = arith.constant 0 : i32
    %c0_i32_0 = arith.constant 0 : i32
    return %c0_i32 : i32
  }
  func.func @transform_1(%arg0: i32) -> (i32, i32) {
    %c0_i32 = arith.constant 0 : i32
    %c0_i32_0 = arith.constant 0 : i32
    return %arg0, %c0_i32 : i32, i32
  }
  func.func @transform_2(%arg0: i32) -> (i32, i32) {
    %c0_i32 = arith.constant 0 : i32
    %c0_i32_0 = arith.constant 0 : i32
    return %arg0, %c0_i32 : i32, i32
  }
}

</mosaic_0001>

<llo_original>
// kernel: tpu_custom_call.1
$region0: #{tpu_custom_call.1}
  #allocation0 [shape = 'u32[]', space=smem, size = 0x4, offset = 0x4, fixed_abs, tag = 'smem constant byte address 0x4 - core index']
  #allocation1 [shape = 'u32[72,128]{1,0:T(1,128)}', space=vmem, size = 0x9000, scoped, tag = 'internal scratch']
  %s0 = inlined_call_operand.hbm [shape: f32[16], index: 0, kind: input, shape index: {}]
  %s1 = inlined_call_operand.hbm [shape: f32[16,128], index: 1, kind: input, shape index: {}]
  %s2 = inlined_call_operand.hbm [shape: f32[16,128], index: 2, kind: output, shape index: {}]
  %s3 = sld [smem:[#allocation0]]
  $region26: #{tpu_custom_call.1} parent=0
    _
  %s5 = ssub.s32 1, %s3
  %s6 = scalar_select 0, %s5, %s3
  $region1: #{tpu_custom_call.1} parent=0
    #allocation2 [shape = 'u8[512]{0}', space=smem, size = 0x200, scoped, tag = 'input window, operand 0, single buffered']
    #allocation3 [shape = 's32[1]{0}', space=sflag, size = 0x4, scoped, tag = 'scoped memory for tpu_custom_call.1']
    #allocation4 [shape = 's32[1]{0}', space=sflag, size = 0x4, scoped, tag = 'scoped memory for tpu_custom_call.1']
    #allocation5 [shape = 's32[1]{0}', space=sflag, size = 0x4, scoped, tag = 'scoped memory for tpu_custom_call.1']
    #allocation6 [shape = 'u8[8192]{0}', space=vmem, size = 0x2000, scoped, tag = 'input window, operand 1, single buffered']
    #allocation7 [shape = 'u8[8192]{0}', space=vmem, size = 0x2000, scoped, tag = 'output window, operand 0, single buffered']
    %7 = vsyncpa [#allocation5], 0
    %8 = vsyncpa [#allocation3], 0
    %9 = vsyncpa [#allocation4], 0
    // Predicated region
    $region2: #{tpu_custom_call.1} parent=1 // pred_check
      _
    $region3: #{tpu_custom_call.1} parent=1 // pred_check_branch
      %11 = sbr.rel (0) target = $region5
    $region4: #{tpu_custom_call.1} parent=1 // pred_region
      %13 = vsyncadd [#allocation5], 0
      %s15 = sshll.u32 %s0, 4
      %s16 = int_to_ptr.hbm [resolvable:$true] %s15
      %18 = dma.hbm_to_smem %s16, 16, [#allocation2], [#allocation5]
    $region5: #{tpu_custom_call.1} parent=1 // pred_fallthru
      _
    // Predicated region
    $region6: #{tpu_custom_call.1} parent=1 // pred_check
      _
    $region7: #{tpu_custom_call.1} parent=1 // pred_check_branch
      %20 = sbr.rel (0) target = $region9
    $region8: #{tpu_custom_call.1} parent=1 // pred_region
      %22 = vsyncadd [#allocation3], 0
      %s23 = sshll.u32 %s1, 4
      %s24 = int_to_ptr.hbm [resolvable:$true] %s23
      %s25 = sshll.u32 [#allocation6], 4
      %s26 = int_to_ptr.vmem [resolvable:$true] %s25
      %31 = dma.hbm_to_vmem [thread:$0]  %s24, 256, %s26, [#allocation3], 128, 128, 8
    $region9: #{tpu_custom_call.1} parent=1 // pred_fallthru
      _
    // Predicated region
    $region10: #{tpu_custom_call.1} parent=1 // pred_check
      _
    $region11: #{tpu_custom_call.1} parent=1 // pred_check_branch
      %33 = sbr.rel (0) target = $region13
    $region12: #{tpu_custom_call.1} parent=1 // pred_region
      %35 = dma.done [#allocation5], 16
    $region13: #{tpu_custom_call.1} parent=1 // pred_fallthru
      _
    // Predicated region
    $region14: #{tpu_custom_call.1} parent=1 // pred_check
      _
    $region15: #{tpu_custom_call.1} parent=1 // pred_check_branch
      %37 = sbr.rel (0) target = $region17
    $region16: #{tpu_custom_call.1} parent=1 // pred_region
      %39 = dma.done [#allocation3], 256
    $region17: #{tpu_custom_call.1} parent=1 // pred_fallthru
      _
    %40 = sfence
    %v41 = vld [vmem:[#allocation6] sm:$0xff]
    %v42 = vld [vmem:[#allocation6 + $0x8] sm:$0xff]
    %s43 = sld [smem:[#allocation2 + $0x4]]
    %v44 = vstv %s43
    %v45 = vmul.f32 %v41, %v44
    %v46 = vmul.f32 %v42, %v44
    %s47 = sld [smem:[#allocation2 + $0x8]]
    %v48 = vstv %s47
    %v49 = vadd.f32 %v45, %v48
    %v50 = vadd.f32 %v46, %v48
    %s51 = sld [smem:[#allocation2 + $0xc]]
    %v52 = vstv %s51
    %v53 = vadd.f32 %v45, %v52
    %v54 = vadd.f32 %v46, %v52
    %v55 = vtanh.pop %v49
    %v56 = vtanh.pop %v50
    %v57 = vtanh.pop %v53
    %v58 = vtanh.pop %v54
    %v59 = vsub.f32 %v55, %v57
    %v60 = vsub.f32 %v56, %v58
    %s61 = sld [smem:[#allocation2]]
    %v62 = vstv %s61
    %v63 = vmul.f32 %v62, %v59
    %v64 = vmul.f32 %v62, %v60
    %s65 = sld [smem:[#allocation2 + $0x5]]
    %v66 = vstv %s65
    %v67 = vmul.f32 %v41, %v66
    %v68 = vmul.f32 %v42, %v66
    %s69 = sld [smem:[#allocation2 + $0x9]]
    %v70 = vstv %s69
    %v71 = vadd.f32 %v67, %v70
    %v72 = vadd.f32 %v68, %v70
    %s73 = sld [smem:[#allocation2 + $0xd]]
    %v74 = vstv %s73
    %v75 = vadd.f32 %v67, %v74
    %v76 = vadd.f32 %v68, %v74
    %v77 = vtanh.pop %v71
    %v78 = vtanh.pop %v72
    %v79 = vtanh.pop %v75
    %v80 = vtanh.pop %v76
    %v81 = vsub.f32 %v77, %v79
    %v82 = vsub.f32 %v78, %v80
    %s83 = sld [smem:[#allocation2 + $0x1]]
    %v84 = vstv %s83
    %v85 = vmul.f32 %v84, %v81
    %v86 = vmul.f32 %v84, %v82
    %v87 = vadd.f32 %v63, %v85
    %v88 = vadd.f32 %v64, %v86
    %s89 = sld [smem:[#allocation2 + $0x6]]
    %v90 = vstv %s89
    %v91 = vmul.f32 %v41, %v90
    %v92 = vmul.f32 %v42, %v90
    %s93 = sld [smem:[#allocation2 + $0xa]]
    %v94 = vstv %s93
    %v95 = vadd.f32 %v91, %v94
    %v96 = vadd.f32 %v92, %v94
    %s97 = sld [smem:[#allocation2 + $0xe]]
    %v98 = vstv %s97
    %v99 = vadd.f32 %v91, %v98
    %v100 = vadd.f32 %v92, %v98
    %v101 = vtanh.pop %v95
    %v102 = vtanh.pop %v96
    %v103 = vtanh.pop %v99
    %v104 = vtanh.pop %v100
    %v105 = vsub.f32 %v101, %v103
    %v106 = vsub.f32 %v102, %v104
    %s107 = sld [smem:[#allocation2 + $0x2]]
    %v108 = vstv %s107
    %v109 = vmul.f32 %v108, %v105
    %v110 = vmul.f32 %v108, %v106
    %v111 = vadd.f32 %v87, %v109
    %v112 = vadd.f32 %v88, %v110
    %s113 = sld [smem:[#allocation2 + $0x7]]
    %v114 = vstv %s113
    %v115 = vmul.f32 %v41, %v114
    %v116 = vmul.f32 %v42, %v114
    %s117 = sld [smem:[#allocation2 + $0xb]]
    %v118 = vstv %s117
    %v119 = vadd.f32 %v115, %v118
    %v120 = vadd.f32 %v116, %v118
    %s121 = sld [smem:[#allocation2 + $0xf]]
    %v122 = vstv %s121
    %v123 = vadd.f32 %v115, %v122
    %v124 = vadd.f32 %v116, %v122
    %v125 = vtanh.pop %v119
    %v126 = vtanh.pop %v120
    %v127 = vtanh.pop %v123
    %v128 = vtanh.pop %v124
    %v129 = vsub.f32 %v125, %v127
    %v130 = vsub.f32 %v126, %v128
    %s131 = sld [smem:[#allocation2 + $0x3]]
    %v132 = vstv %s131
    %v133 = vmul.f32 %v132, %v129
    %v134 = vmul.f32 %v132, %v130
    %v135 = vadd.f32 %v111, %v133
    %v136 = vadd.f32 %v112, %v134
    %137 = vst [vmem:[#allocation7] sm:$0xff] %v135
    %138 = vst [vmem:[#allocation7 + $0x8] sm:$0xff] %v136
    // Predicated region
    $region18: #{tpu_custom_call.1} parent=1 // pred_check
      _
    $region19: #{tpu_custom_call.1} parent=1 // pred_check_branch
      %140 = sbr.rel (0) target = $region21
    $region20: #{tpu_custom_call.1} parent=1 // pred_region
      %142 = vsyncadd [#allocation4], 0
      %s143 = sshll.u32 [#allocation7], 4
      %s144 = int_to_ptr.vmem [resolvable:$true] %s143
      %s145 = sshll.u32 %s2, 4
      %s146 = int_to_ptr.hbm [resolvable:$true] %s145
      %151 = dma.vmem_to_hbm [thread:$0]  %s144, 256, %s146, [#allocation4], 128, 128, 8
    $region21: #{tpu_custom_call.1} parent=1 // pred_fallthru
      _
    // Predicated region
    $region22: #{tpu_custom_call.1} parent=1 // pred_check
      _
    $region23: #{tpu_custom_call.1} parent=1 // pred_check_branch
      %153 = sbr.rel (0) target = $region25
    $region24: #{tpu_custom_call.1} parent=1 // pred_region
      %155 = dma.done [#allocation4], 256
    $region25: #{tpu_custom_call.1} parent=1 // pred_fallthru
      _
    %156 = vsyncpa [#allocation3], 1
    %157 = vsyncpa [#allocation4], 1
    %158 = vsyncpa [#allocation5], 1

</llo_original>
